<compile_context>
chip_gen: v6e
topology: v6e:2x2x1
jax: 0.10.0
libtpu: 0.0.40
codegen_flags: <defaults>
</compile_context>

<pallas_src>
import functools

import jax
import jax.numpy as jnp
from jax.experimental import pallas as pl
from jax.experimental.pallas import tpu as pltpu


def _round_up(n, m):
    return ((n + m - 1) // m) * m


# ------------------------------ Fused kernel ------------------------------- #

def _mlp_fused_kernel(x_ref, *refs, num_hidden, negative_slope):
    """refs = (w0, b0, w1, b1, ..., wL, bL, o_ref).

    Chains every Linear(+folded BN)+LeakyReLU and the final Linear inside one
    kernel body; intermediates live in vregs/VMEM only.
    """
    o_ref = refs[-1]
    wb = refs[:-1]
    h = x_ref[...]                                     # (TM, F0) bf16
    for i in range(num_hidden + 1):
        w = wb[2 * i][...]                             # (Fi, Fi+1) bf16, resident
        b = wb[2 * i + 1][...]                         # (1, Fi+1)  f32
        # bf16 operands -> MXU, f32 accumulate.
        y = jnp.dot(h, w, preferred_element_type=jnp.float32) + b
        if i < num_hidden:
            # LeakyReLU in f32 (VPU); Dropout = identity in eval mode.
            # Cast straight back to bf16 to feed the next MXU matmul.
            h = jnp.where(y >= 0, y, negative_slope * y).astype(w.dtype)
        else:
            h = y
    o_ref[...] = h.astype(o_ref.dtype)


# --------------------------- Parameter construction ------------------------ #

def init_mlp_params(key, input_size, hidden_layers, output_size,
                    eps=1e-5, weight_dtype=jnp.bfloat16):
    """Layer params with BN folded in and feature dims zero-padded to 128."""
    sizes = [input_size] + list(hidden_layers) + [output_size]
    layers = []
    for i in range(len(sizes) - 1):
        fan_in, fan_out = sizes[i], sizes[i + 1]
        key, kw, kb = jax.random.split(key, 3)
        bound = 1.0 / (fan_in ** 0.5)
        # Stored as (in, out); PyTorch stores (out, in).
        w = jax.random.uniform(kw, (fan_in, fan_out), jnp.float32, -bound, bound)
        b = jax.random.uniform(kb, (fan_out,), jnp.float32, -bound, bound)

        if i < len(hidden_layers):
            # BatchNorm1d eval-mode affine, folded into the Linear layer.
            # (Defaults; load real trained BN stats here if available.)
            gamma = jnp.ones((fan_out,), jnp.float32)
            beta = jnp.zeros((fan_out,), jnp.float32)
            run_mean = jnp.zeros((fan_out,), jnp.float32)
            run_var = jnp.ones((fan_out,), jnp.float32)
            scale = gamma / jnp.sqrt(run_var + eps)
            shift = beta - run_mean * scale
            w = w * scale[None, :]
            b = b * scale + shift

        # Zero-pad to lane-dense 128 multiples (padded lanes stay exactly 0).
        in_pad = _round_up(fan_in, 128)
        out_pad = _round_up(fan_out, 128)
        w_pad = jnp.zeros((in_pad, out_pad), jnp.float32).at[:fan_in, :fan_out].set(w)
        b_pad = jnp.zeros((1, out_pad), jnp.float32).at[0, :fan_out].set(b)
        layers.append({"w": w_pad.astype(weight_dtype), "b": b_pad})
    return layers


# ---------------------------------- Forward --------------------------------- #

def _choose_tm(batch, tm_max=512):
    """Adaptive batch tile: bounded padding waste, fat M for the MXU, and at
    least 2 grid steps for big batches so v7x's two TensorCores both get work."""
    n = max(1, -(-batch // tm_max))
    if n == 1 and batch >= 256:        # split only when each core gets >=128 rows
        n = 2
    tm = _round_up(-(-batch // n), 16)  # >=16 rows: full bf16 sublane tiles
    return tm


def mlp_forward(x, layers, output_size, *, negative_slope=0.01, tm_max=512,
                single_buffer_weights=True):
    B, f_in = x.shape
    f0_pad = layers[0]["w"].shape[0]
    fo_pad = layers[-1]["w"].shape[1]
    num_hidden = len(layers) - 1

    tm = _choose_tm(B, tm_max)
    b_pad = _round_up(B, tm)

    # bf16 activations halve the streamed HBM bytes.  Pad only when necessary
    # (avoids materializing an extra HBM copy of the activations).
    if (b_pad, f0_pad) != (B, f_in):
        x_in = jnp.pad(x, ((0, b_pad - B), (0, f0_pad - f_in))).astype(jnp.bfloat16)
    else:
        x_in = x.astype(jnp.bfloat16)

    kernel = functools.partial(_mlp_fused_kernel,
                               num_hidden=num_hidden,
                               negative_slope=negative_slope)

    # Streaming x tile: default double buffering.
    in_specs = [pl.BlockSpec((tm, f0_pad), lambda i: (i, 0))]
    operands = [x_in]

    # Grid-invariant weights/biases: single-buffered residents (block index
    # never changes, so double-buffering would only double their VMEM).
    if single_buffer_weights:
        def _resident_spec(shape):
            return pl.BlockSpec(shape, lambda i: (0, 0),
                                pipeline_mode=pl.Buffered(1))
    else:
        def _resident_spec(shape):
            return pl.BlockSpec(shape, lambda i: (0, 0))

    for layer in layers:
        w, b = layer["w"], layer["b"]
        in_specs.append(_resident_spec(w.shape))
        in_specs.append(_resident_spec(b.shape))
        operands.extend([w, b])

    # ---- VMEM budget: real footprint, clamped to this chip's capacity. ----
    wbuf = 1 if single_buffer_weights else 2
    weight_bytes = sum(l["w"].size * l["w"].dtype.itemsize for l in layers)
    bias_bytes = sum(l["b"].size * 4 for l in layers)
    max_f = max([f0_pad] + [l["w"].shape[1] for l in layers])
    footprint = (wbuf * (weight_bytes + bias_bytes)
                 + 2 * tm * f0_pad * 2          # double-buffered bf16 input tile
                 + 2 * tm * fo_pad * 4          # double-buffered f32 output tile
                 + 3 * tm * max_f * 4)          # live f32 intermediates headroom
    try:
        vmem_cap = pltpu.get_tpu_info().vmem_capacity_bytes
    except Exception:
        vmem_cap = 64 * 1024 * 1024             # conservative: v7x per-TC VMEM
    vmem_limit = int(min(vmem_cap * 0.875,
                         max(32 * 1024 * 1024, int(footprint * 1.25))))
    # TODO(synk): if resident weights alone exceed the per-core VMEM budget
    # (very wide MLPs on v7x), fall back to streaming weights via a K/N-tiled
    # emit_pipeline instead of full residency.

    flops = 2 * b_pad * sum(l["w"].shape[0] * l["w"].shape[1] for l in layers)
    bytes_accessed = int(x_in.size * x_in.dtype.itemsize
                         + weight_bytes + bias_bytes
                         + b_pad * fo_pad * 4)

    out = pl.pallas_call(
        kernel,
        out_shape=jax.ShapeDtypeStruct((b_pad, fo_pad), jnp.float32),
        grid=(b_pad // tm,),
        in_specs=in_specs,
        out_specs=pl.BlockSpec((tm, fo_pad), lambda i: (i, 0)),
        compiler_params=pltpu.CompilerParams(
            dimension_semantics=("parallel",),
            vmem_limit_bytes=vmem_limit),
        cost_estimate=pl.CostEstimate(flops=flops,
                                      transcendentals=0,
                                      bytes_accessed=bytes_accessed),
    )(*operands)

    return out[:B, :output_size]


def mlp_reference(x, layers, output_size, *, negative_slope=0.01):
    """Pure-jnp reference with identical (padded, bf16) numerics."""
    B, f_in = x.shape
    f0_pad = layers[0]["w"].shape[0]
    h = jnp.zeros((B, f0_pad), jnp.float32).at[:, :f_in].set(x).astype(jnp.bfloat16)
    for i, layer in enumerate(layers):
        w, b = layer["w"], layer["b"]
        y = jnp.dot(h, w, preferred_element_type=jnp.float32) + b
        if i < len(layers) - 1:
            h = jnp.where(y >= 0, y, negative_slope * y).astype(w.dtype)
        else:
            h = y
    return h[:, :output_size]


# ----------------------------------- Main ----------------------------------- #

if __name__ == "__main__":
    batch = 8
    input_size = 16
    hidden_layers = [32, 32]
    output_size = 8
    # NOTE: at these toy dims (features pad to 128 lanes, single grid step) the
    # kernel is dispatch/latency bound; the tiling / VMEM-budget logic above
    # only pays off at realistic widths and batch sizes.

    key = jax.random.PRNGKey(0)
    key, kx = jax.random.split(key)
    x = jax.random.normal(kx, (batch, input_size), jnp.float32)

    layers = init_mlp_params(key, input_size, hidden_layers, output_size)

    def run(single_buffer):
        fwd = jax.jit(lambda xx: mlp_forward(xx, layers, output_size,
                                             single_buffer_weights=single_buffer))
        return jax.block_until_ready(fwd(x))

    try:
        out = run(True)
    except Exception:
        # pipeline_mode=pl.Buffered(1) unsupported on this jax build: fall back
        # to default double-buffered resident weights (correctness unchanged).
        out = run(False)

    ref = mlp_reference(x, layers, output_size)
    assert out.shape == (batch, output_size)
    assert jnp.allclose(out, ref, atol=1e-3, rtol=1e-3), \
        float(jnp.max(jnp.abs(out - ref)))

    print("KERNEL_OK")
</pallas_src>

<mosaic_0001>
module attributes {stable_mosaic.version = 11 : i64} {
  func.func @_mlp_fused_kernel(%arg0: i32, %arg1: memref<16x128xbf16, #tpu.memory_space<vmem>>, %arg2: memref<128x128xbf16, #tpu.memory_space<vmem>>, %arg3: memref<1x128xf32, #tpu.memory_space<vmem>>, %arg4: memref<128x128xbf16, #tpu.memory_space<vmem>>, %arg5: memref<1x128xf32, #tpu.memory_space<vmem>>, %arg6: memref<128x128xbf16, #tpu.memory_space<vmem>>, %arg7: memref<1x128xf32, #tpu.memory_space<vmem>>, %arg8: memref<16x128xf32, #tpu.memory_space<vmem>>) attributes {dimension_semantics = [#tpu.dimension_semantics<parallel>], iteration_bounds = array<i64: 1>, scalar_prefetch = 0 : i64, scratch_operands = 0 : i64, tpu.core_type = #tpu.core_type<tc>, window_params = [{transform_indices = @transform_0, window_bounds = array<i64: 16, 128>}, {pipeline_mode = #tpu.pipeline_mode<synchronous>, transform_indices = @transform_1, window_bounds = array<i64: 128, 128>}, {pipeline_mode = #tpu.pipeline_mode<synchronous>, transform_indices = @transform_2, window_bounds = array<i64: 1, 128>}, {pipeline_mode = #tpu.pipeline_mode<synchronous>, transform_indices = @transform_3, window_bounds = array<i64: 128, 128>}, {pipeline_mode = #tpu.pipeline_mode<synchronous>, transform_indices = @transform_4, window_bounds = array<i64: 1, 128>}, {pipeline_mode = #tpu.pipeline_mode<synchronous>, transform_indices = @transform_5, window_bounds = array<i64: 128, 128>}, {pipeline_mode = #tpu.pipeline_mode<synchronous>, transform_indices = @transform_6, window_bounds = array<i64: 1, 128>}, {transform_indices = @transform_7, window_bounds = array<i64: 16, 128>}]} {
    %c0 = arith.constant 0 : index
    %c0_0 = arith.constant 0 : index
    %0 = vector.load %arg1[%c0, %c0_0] : memref<16x128xbf16, #tpu.memory_space<vmem>>, vector<16x128xbf16>
    %c0_1 = arith.constant 0 : index
    %c0_2 = arith.constant 0 : index
    %1 = vector.load %arg2[%c0_1, %c0_2] : memref<128x128xbf16, #tpu.memory_space<vmem>>, vector<128x128xbf16>
    %c0_3 = arith.constant 0 : index
    %c0_4 = arith.constant 0 : index
    %2 = vector.load %arg3[%c0_3, %c0_4] : memref<1x128xf32, #tpu.memory_space<vmem>>, vector<1x128xf32>
    %cst = arith.constant dense<0.000000e+00> : vector<16x128xf32>
    %3 = tpu.matmul %0, %1, %cst {dimension_numbers = #tpu.dot_dimension_numbers<[1], [0], [0], [1], [0, 0, 1, 1], [], []>} : vector<16x128xbf16>, vector<128x128xbf16>, vector<16x128xf32> -> vector<16x128xf32>
    %4 = vector.broadcast %2 : vector<1x128xf32> to vector<16x128xf32>
    %5 = arith.addf %3, %4 : vector<16x128xf32>
    %cst_5 = arith.constant 0.000000e+00 : f32
    %6 = vector.broadcast %cst_5 : f32 to vector<16x128xf32>
    %7 = arith.cmpf oge, %5, %6 : vector<16x128xf32>
    %cst_6 = arith.constant 0.00999999977 : f32
    %8 = vector.broadcast %cst_6 : f32 to vector<16x128xf32>
    %9 = arith.mulf %8, %5 : vector<16x128xf32>
    %10 = arith.select %7, %5, %9 : vector<16x128xi1>, vector<16x128xf32>
    %11 = arith.truncf %10 : vector<16x128xf32> to vector<16x128xbf16>
    %c0_7 = arith.constant 0 : index
    %c0_8 = arith.constant 0 : index
    %12 = vector.load %arg4[%c0_7, %c0_8] : memref<128x128xbf16, #tpu.memory_space<vmem>>, vector<128x128xbf16>
    %c0_9 = arith.constant 0 : index
    %c0_10 = arith.constant 0 : index
    %13 = vector.load %arg5[%c0_9, %c0_10] : memref<1x128xf32, #tpu.memory_space<vmem>>, vector<1x128xf32>
    %cst_11 = arith.constant dense<0.000000e+00> : vector<16x128xf32>
    %14 = tpu.matmul %11, %12, %cst_11 {dimension_numbers = #tpu.dot_dimension_numbers<[1], [0], [0], [1], [0, 0, 1, 1], [], []>} : vector<16x128xbf16>, vector<128x128xbf16>, vector<16x128xf32> -> vector<16x128xf32>
    %15 = vector.broadcast %13 : vector<1x128xf32> to vector<16x128xf32>
    %16 = arith.addf %14, %15 : vector<16x128xf32>
    %cst_12 = arith.constant 0.000000e+00 : f32
    %17 = vector.broadcast %cst_12 : f32 to vector<16x128xf32>
    %18 = arith.cmpf oge, %16, %17 : vector<16x128xf32>
    %cst_13 = arith.constant 0.00999999977 : f32
    %19 = vector.broadcast %cst_13 : f32 to vector<16x128xf32>
    %20 = arith.mulf %19, %16 : vector<16x128xf32>
    %21 = arith.select %18, %16, %20 : vector<16x128xi1>, vector<16x128xf32>
    %22 = arith.truncf %21 : vector<16x128xf32> to vector<16x128xbf16>
    %c0_14 = arith.constant 0 : index
    %c0_15 = arith.constant 0 : index
    %23 = vector.load %arg6[%c0_14, %c0_15] : memref<128x128xbf16, #tpu.memory_space<vmem>>, vector<128x128xbf16>
    %c0_16 = arith.constant 0 : index
    %c0_17 = arith.constant 0 : index
    %24 = vector.load %arg7[%c0_16, %c0_17] : memref<1x128xf32, #tpu.memory_space<vmem>>, vector<1x128xf32>
    %cst_18 = arith.constant dense<0.000000e+00> : vector<16x128xf32>
    %25 = tpu.matmul %22, %23, %cst_18 {dimension_numbers = #tpu.dot_dimension_numbers<[1], [0], [0], [1], [0, 0, 1, 1], [], []>} : vector<16x128xbf16>, vector<128x128xbf16>, vector<16x128xf32> -> vector<16x128xf32>
    %26 = vector.broadcast %24 : vector<1x128xf32> to vector<16x128xf32>
    %27 = arith.addf %25, %26 : vector<16x128xf32>
    %c0_19 = arith.constant 0 : index
    %c0_20 = arith.constant 0 : index
    %28 = vector.load %arg8[%c0_19, %c0_20] : memref<16x128xf32, #tpu.memory_space<vmem>>, vector<16x128xf32>
    tpu.vector_store %arg8[%c0_19, %c0_20], %27 {strides = array<i32>} : memref<16x128xf32, #tpu.memory_space<vmem>>, vector<16x128xf32>,
    return
  }
  func.func @transform_0(%arg0: i32) -> (i32, i32) {
    %c0_i32 = arith.constant 0 : i32
    %c0_i32_0 = arith.constant 0 : i32
    return %arg0, %c0_i32 : i32, i32
  }
  func.func @transform_1(%arg0: i32) -> (i32, i32) {
    %c0_i32 = arith.constant 0 : i32
    %c0_i32_0 = arith.constant 0 : i32
    %c0_i32_1 = arith.constant 0 : i32
    return %c0_i32, %c0_i32_0 : i32, i32
  }
  func.func @transform_2(%arg0: i32) -> (i32, i32) {
    %c0_i32 = arith.constant 0 : i32
    %c0_i32_0 = arith.constant 0 : i32
    %c0_i32_1 = arith.constant 0 : i32
    return %c0_i32, %c0_i32_0 : i32, i32
  }
  func.func @transform_3(%arg0: i32) -> (i32, i32) {
    %c0_i32 = arith.constant 0 : i32
    %c0_i32_0 = arith.constant 0 : i32
    %c0_i32_1 = arith.constant 0 : i32
    return %c0_i32, %c0_i32_0 : i32, i32
  }
  func.func @transform_4(%arg0: i32) -> (i32, i32) {
    %c0_i32 = arith.constant 0 : i32
    %c0_i32_0 = arith.constant 0 : i32
    %c0_i32_1 = arith.constant 0 : i32
    return %c0_i32, %c0_i32_0 : i32, i32
  }
  func.func @transform_5(%arg0: i32) -> (i32, i32) {
    %c0_i32 = arith.constant 0 : i32
    %c0_i32_0 = arith.constant 0 : i32
    %c0_i32_1 = arith.constant 0 : i32
    return %c0_i32, %c0_i32_0 : i32, i32
  }
  func.func @transform_6(%arg0: i32) -> (i32, i32) {
    %c0_i32 = arith.constant 0 : i32
    %c0_i32_0 = arith.constant 0 : i32
    %c0_i32_1 = arith.constant 0 : i32
    return %c0_i32, %c0_i32_0 : i32, i32
  }
  func.func @transform_7(%arg0: i32) -> (i32, i32) {
    %c0_i32 = arith.constant 0 : i32
    %c0_i32_0 = arith.constant 0 : i32
    return %arg0, %c0_i32 : i32, i32
  }
}

module attributes {stable_mosaic.version = 11 : i64} {
  func.func @_mlp_fused_kernel(%arg0: i32, %arg1: memref<16x128xbf16, #tpu.memory_space<vmem>>, %arg2: memref<128x128xbf16, #tpu.memory_space<vmem>>, %arg3: memref<1x128xf32, #tpu.memory_space<vmem>>, %arg4: memref<128x128xbf16, #tpu.memory_space<vmem>>, %arg5: memref<1x128xf32, #tpu.memory_space<vmem>>, %arg6: memref<128x128xbf16, #tpu.memory_space<vmem>>, %arg7: memref<1x128xf32, #tpu.memory_space<vmem>>, %arg8: memref<16x128xf32, #tpu.memory_space<vmem>>) attributes {dimension_semantics = [#tpu.dimension_semantics<parallel>], iteration_bounds = array<i64: 1>, scalar_prefetch = 0 : i64, scratch_operands = 0 : i64, tpu.core_type = #tpu.core_type<tc>, window_params = [{transform_indices = @transform_0, window_bounds = array<i64: 16, 128>}, {pipeline_mode = #tpu.pipeline_mode<synchronous>, transform_indices = @transform_1, window_bounds = array<i64: 128, 128>}, {pipeline_mode = #tpu.pipeline_mode<synchronous>, transform_indices = @transform_2, window_bounds = array<i64: 1, 128>}, {pipeline_mode = #tpu.pipeline_mode<synchronous>, transform_indices = @transform_3, window_bounds = array<i64: 128, 128>}, {pipeline_mode = #tpu.pipeline_mode<synchronous>, transform_indices = @transform_4, window_bounds = array<i64: 1, 128>}, {pipeline_mode = #tpu.pipeline_mode<synchronous>, transform_indices = @transform_5, window_bounds = array<i64: 128, 128>}, {pipeline_mode = #tpu.pipeline_mode<synchronous>, transform_indices = @transform_6, window_bounds = array<i64: 1, 128>}, {transform_indices = @transform_7, window_bounds = array<i64: 16, 128>}]} {
    %c0 = arith.constant 0 : index
    %c0_0 = arith.constant 0 : index
    %0 = vector.load %arg1[%c0, %c0_0] : memref<16x128xbf16, #tpu.memory_space<vmem>>, vector<16x128xbf16>
    %c0_1 = arith.constant 0 : index
    %c0_2 = arith.constant 0 : index
    %1 = vector.load %arg2[%c0_1, %c0_2] : memref<128x128xbf16, #tpu.memory_space<vmem>>, vector<128x128xbf16>
    %c0_3 = arith.constant 0 : index
    %c0_4 = arith.constant 0 : index
    %2 = vector.load %arg3[%c0_3, %c0_4] : memref<1x128xf32, #tpu.memory_space<vmem>>, vector<1x128xf32>
    %cst = arith.constant dense<0.000000e+00> : vector<16x128xf32>
    %3 = tpu.matmul %0, %1, %cst {dimension_numbers = #tpu.dot_dimension_numbers<[1], [0], [0], [1], [0, 0, 1, 1], [], []>} : vector<16x128xbf16>, vector<128x128xbf16>, vector<16x128xf32> -> vector<16x128xf32>
    %4 = vector.broadcast %2 : vector<1x128xf32> to vector<16x128xf32>
    %5 = arith.addf %3, %4 : vector<16x128xf32>
    %cst_5 = arith.constant 0.000000e+00 : f32
    %6 = vector.broadcast %cst_5 : f32 to vector<16x128xf32>
    %7 = arith.cmpf oge, %5, %6 : vector<16x128xf32>
    %cst_6 = arith.constant 0.00999999977 : f32
    %8 = vector.broadcast %cst_6 : f32 to vector<16x128xf32>
    %9 = arith.mulf %8, %5 : vector<16x128xf32>
    %10 = arith.select %7, %5, %9 : vector<16x128xi1>, vector<16x128xf32>
    %11 = arith.truncf %10 : vector<16x128xf32> to vector<16x128xbf16>
    %c0_7 = arith.constant 0 : index
    %c0_8 = arith.constant 0 : index
    %12 = vector.load %arg4[%c0_7, %c0_8] : memref<128x128xbf16, #tpu.memory_space<vmem>>, vector<128x128xbf16>
    %c0_9 = arith.constant 0 : index
    %c0_10 = arith.constant 0 : index
    %13 = vector.load %arg5[%c0_9, %c0_10] : memref<1x128xf32, #tpu.memory_space<vmem>>, vector<1x128xf32>
    %cst_11 = arith.constant dense<0.000000e+00> : vector<16x128xf32>
    %14 = tpu.matmul %11, %12, %cst_11 {dimension_numbers = #tpu.dot_dimension_numbers<[1], [0], [0], [1], [0, 0, 1, 1], [], []>} : vector<16x128xbf16>, vector<128x128xbf16>, vector<16x128xf32> -> vector<16x128xf32>
    %15 = vector.broadcast %13 : vector<1x128xf32> to vector<16x128xf32>
    %16 = arith.addf %14, %15 : vector<16x128xf32>
    %cst_12 = arith.constant 0.000000e+00 : f32
    %17 = vector.broadcast %cst_12 : f32 to vector<16x128xf32>
    %18 = arith.cmpf oge, %16, %17 : vector<16x128xf32>
    %cst_13 = arith.constant 0.00999999977 : f32
    %19 = vector.broadcast %cst_13 : f32 to vector<16x128xf32>
    %20 = arith.mulf %19, %16 : vector<16x128xf32>
    %21 = arith.select %18, %16, %20 : vector<16x128xi1>, vector<16x128xf32>
    %22 = arith.truncf %21 : vector<16x128xf32> to vector<16x128xbf16>
    %c0_14 = arith.constant 0 : index
    %c0_15 = arith.constant 0 : index
    %23 = vector.load %arg6[%c0_14, %c0_15] : memref<128x128xbf16, #tpu.memory_space<vmem>>, vector<128x128xbf16>
    %c0_16 = arith.constant 0 : index
    %c0_17 = arith.constant 0 : index
    %24 = vector.load %arg7[%c0_16, %c0_17] : memref<1x128xf32, #tpu.memory_space<vmem>>, vector<1x128xf32>
    %cst_18 = arith.constant dense<0.000000e+00> : vector<16x128xf32>
    %25 = tpu.matmul %22, %23, %cst_18 {dimension_numbers = #tpu.dot_dimension_numbers<[1], [0], [0], [1], [0, 0, 1, 1], [], []>} : vector<16x128xbf16>, vector<128x128xbf16>, vector<16x128xf32> -> vector<16x128xf32>
    %26 = vector.broadcast %24 : vector<1x128xf32> to vector<16x128xf32>
    %27 = arith.addf %25, %26 : vector<16x128xf32>
    %c0_19 = arith.constant 0 : index
    %c0_20 = arith.constant 0 : index
    %28 = vector.load %arg8[%c0_19, %c0_20] : memref<16x128xf32, #tpu.memory_space<vmem>>, vector<16x128xf32>
    tpu.vector_store %arg8[%c0_19, %c0_20], %27 {strides = array<i32>} : memref<16x128xf32, #tpu.memory_space<vmem>>, vector<16x128xf32>,
    return
  }
  func.func @transform_0(%arg0: i32) -> (i32, i32) {
    %c0_i32 = arith.constant 0 : i32
    %c0_i32_0 = arith.constant 0 : i32
    return %arg0, %c0_i32 : i32, i32
  }
  func.func @transform_1(%arg0: i32) -> (i32, i32) {
    %c0_i32 = arith.constant 0 : i32
    %c0_i32_0 = arith.constant 0 : i32
    %c0_i32_1 = arith.constant 0 : i32
    return %c0_i32, %c0_i32_0 : i32, i32
  }
  func.func @transform_2(%arg0: i32) -> (i32, i32) {
    %c0_i32 = arith.constant 0 : i32
    %c0_i32_0 = arith.constant 0 : i32
    %c0_i32_1 = arith.constant 0 : i32
    return %c0_i32, %c0_i32_0 : i32, i32
  }
  func.func @transform_3(%arg0: i32) -> (i32, i32) {
    %c0_i32 = arith.constant 0 : i32
    %c0_i32_0 = arith.constant 0 : i32
    %c0_i32_1 = arith.constant 0 : i32
    return %c0_i32, %c0_i32_0 : i32, i32
  }
  func.func @transform_4(%arg0: i32) -> (i32, i32) {
    %c0_i32 = arith.constant 0 : i32
    %c0_i32_0 = arith.constant 0 : i32
    %c0_i32_1 = arith.constant 0 : i32
    return %c0_i32, %c0_i32_0 : i32, i32
  }
  func.func @transform_5(%arg0: i32) -> (i32, i32) {
    %c0_i32 = arith.constant 0 : i32
    %c0_i32_0 = arith.constant 0 : i32
    %c0_i32_1 = arith.constant 0 : i32
    return %c0_i32, %c0_i32_0 : i32, i32
  }
  func.func @transform_6(%arg0: i32) -> (i32, i32) {
    %c0_i32 = arith.constant 0 : i32
    %c0_i32_0 = arith.constant 0 : i32
    %c0_i32_1 = arith.constant 0 : i32
    return %c0_i32, %c0_i32_0 : i32, i32
  }
  func.func @transform_7(%arg0: i32) -> (i32, i32) {
    %c0_i32 = arith.constant 0 : i32
    %c0_i32_0 = arith.constant 0 : i32
    return %arg0, %c0_i32 : i32, i32
  }
}

</mosaic_0001>

<llo_original>
// kernel: _lambda_.1
$region0: #{_lambda_.1}
  #allocation0 [shape = 'u32[]', space=smem, size = 0x4, offset = 0x4, fixed_abs, tag = 'smem constant byte address 0x4 - core index']
  #allocation1 [shape = 'u32[144,128]{1,0:T(1,128)}', space=vmem, size = 0x12000, scoped, tag = 'internal scratch']
  %s0 = inlined_call_operand.vmem [shape: bf16[16,128], index: 0, kind: input, shape index: {}]
  %s1 = inlined_call_operand.hbm [shape: bf16[128,128], index: 1, kind: input, shape index: {}]
  %s2 = inlined_call_operand.vmem [shape: f32[1,128], index: 2, kind: input, shape index: {}]
  %s3 = inlined_call_operand.hbm [shape: bf16[128,128], index: 3, kind: input, shape index: {}]
  %s4 = inlined_call_operand.vmem [shape: f32[1,128], index: 4, kind: input, shape index: {}]
  %s5 = inlined_call_operand.hbm [shape: bf16[128,128], index: 5, kind: input, shape index: {}]
  %s6 = inlined_call_operand.vmem [shape: f32[1,128], index: 6, kind: input, shape index: {}]
  %s7 = inlined_call_operand.vmem [shape: f32[16,128], index: 7, kind: output, shape index: {}]
  %s8 = sld [smem:[#allocation0]]
  $region50: #{_lambda_.1} parent=0
    _
  %s10 = ssub.s32 1, %s8
  %s11 = scalar_select 0, %s10, %s8
  $region1: #{_lambda_.1} parent=0
    #allocation2 [shape = 'u8[32768]{0}', space=vmem, size = 0x8000, scoped, tag = 'input window, operand 1, single buffered']
    #allocation3 [shape = 's32[1]{0}', space=sflag, size = 0x4, scoped, tag = 'scoped memory for _lambda_.1']
    #allocation4 [shape = 'u8[32768]{0}', space=vmem, size = 0x8000, scoped, tag = 'input window, operand 3, single buffered']
    #allocation5 [shape = 's32[1]{0}', space=sflag, size = 0x4, scoped, tag = 'scoped memory for _lambda_.1']
    #allocation6 [shape = 'u8[32768]{0}', space=vmem, size = 0x8000, scoped, tag = 'input window, operand 5, single buffered']
    %12 = vsyncpa [#allocation3], 0
    %13 = vsyncpa [#allocation5], 0
    // Predicated region
    $region2: #{_lambda_.1} parent=1 // pred_check
      _
    $region3: #{_lambda_.1} parent=1 // pred_check_branch
      %15 = sbr.rel (0) target = $region5
    $region4: #{_lambda_.1} parent=1 // pred_region
      _
    $region5: #{_lambda_.1} parent=1 // pred_fallthru
      _
    // Predicated region
    $region6: #{_lambda_.1} parent=1 // pred_check
      _
    $region7: #{_lambda_.1} parent=1 // pred_check_branch
      %17 = sbr.rel (0) target = $region9
    $region8: #{_lambda_.1} parent=1 // pred_region
      %s19 = ssub.s32 1024, 1024
      %20 = vsyncadd [#allocation3], %s19
      %s21 = sshll.u32 [#allocation2], 4
      %s22 = int_to_ptr.vmem [resolvable:$true] %s21
      %27 = dma.hbm_to_vmem [thread:$0]  %s1, 1024, %s22, [#allocation3], 64, 64, 4
    $region9: #{_lambda_.1} parent=1 // pred_fallthru
      _
    // Predicated region
    $region10: #{_lambda_.1} parent=1 // pred_check
      _
    $region11: #{_lambda_.1} parent=1 // pred_check_branch
      %29 = sbr.rel (0) target = $region13
    $region12: #{_lambda_.1} parent=1 // pred_region
      _
    $region13: #{_lambda_.1} parent=1 // pred_fallthru
      _
    // Predicated region
    $region14: #{_lambda_.1} parent=1 // pred_check
      _
    $region15: #{_lambda_.1} parent=1 // pred_check_branch
      %31 = sbr.rel (0) target = $region17
    $region16: #{_lambda_.1} parent=1 // pred_region
      %s33 = ssub.s32 1024, 1024
      %34 = vsyncadd [#allocation5], %s33
      %s35 = sshll.u32 [#allocation4], 4
      %s36 = int_to_ptr.vmem [resolvable:$true] %s35
      %41 = dma.hbm_to_vmem [thread:$0]  %s3, 1024, %s36, [#allocation5], 64, 64, 4
    $region17: #{_lambda_.1} parent=1 // pred_fallthru
      _
    // Predicated region
    $region18: #{_lambda_.1} parent=1 // pred_check
      _
    $region19: #{_lambda_.1} parent=1 // pred_check_branch
      %43 = sbr.rel (0) target = $region21
    $region20: #{_lambda_.1} parent=1 // pred_region
      _
    $region21: #{_lambda_.1} parent=1 // pred_fallthru
      _
    // Predicated region
    $region22: #{_lambda_.1} parent=1 // pred_check
      _
    $region23: #{_lambda_.1} parent=1 // pred_check_branch
      %45 = sbr.rel (0) target = $region25
    $region24: #{_lambda_.1} parent=1 // pred_region
      %s47 = ssub.s32 1024, 1024
      %48 = vsyncadd [#allocation5], %s47
      %s49 = sshll.u32 [#allocation6], 4
      %s50 = int_to_ptr.vmem [resolvable:$true] %s49
      %55 = dma.hbm_to_vmem [thread:$0]  %s5, 1024, %s50, [#allocation5], 64, 64, 4
    $region25: #{_lambda_.1} parent=1 // pred_fallthru
      _
    // Predicated region
    $region26: #{_lambda_.1} parent=1 // pred_check
      _
    $region27: #{_lambda_.1} parent=1 // pred_check_branch
      %57 = sbr.rel (0) target = $region29
    $region28: #{_lambda_.1} parent=1 // pred_region
      _
    $region29: #{_lambda_.1} parent=1 // pred_fallthru
      _
    // Predicated region
    $region30: #{_lambda_.1} parent=1 // pred_check
      _
    $region31: #{_lambda_.1} parent=1 // pred_check_branch
      %59 = sbr.rel (0) target = $region33
    $region32: #{_lambda_.1} parent=1 // pred_region
      %60 = dma.done [#allocation3], 1024
    $region33: #{_lambda_.1} parent=1 // pred_fallthru
      _
    // Predicated region
    $region34: #{_lambda_.1} parent=1 // pred_check
      _
    $region35: #{_lambda_.1} parent=1 // pred_check_branch
      %62 = sbr.rel (0) target = $region37
    $region36: #{_lambda_.1} parent=1 // pred_region
      %63 = dma.done [#allocation5], 1024
    $region37: #{_lambda_.1} parent=1 // pred_fallthru
      _
    // Predicated region
    $region38: #{_lambda_.1} parent=1 // pred_check
      _
    $region39: #{_lambda_.1} parent=1 // pred_check_branch
      %65 = sbr.rel (0) target = $region41
    $region40: #{_lambda_.1} parent=1 // pred_region
      %66 = dma.done [#allocation5], 1024
    $region41: #{_lambda_.1} parent=1 // pred_fallthru
      _
    %v68 = vld [vmem:[%s0] sm:$0xf]
    %v69 = vld [vmem:[%s0 + $0x4] sm:$0xf]
    %v70 = vld [vmem:[#allocation2] sm:$0xf]
    %v71 = vld [vmem:[#allocation2 + $0x4] sm:$0xf]
    %v72 = vld [vmem:[#allocation2 + $0x8] sm:$0xf]
    %v73 = vld [vmem:[#allocation2 + $0xc] sm:$0xf]
    %v74 = vld [vmem:[#allocation2 + $0x10] sm:$0xf]
    %v75 = vld [vmem:[#allocation2 + $0x14] sm:$0xf]
    %v76 = vld [vmem:[#allocation2 + $0x18] sm:$0xf]
    %v77 = vld [vmem:[#allocation2 + $0x1c] sm:$0xf]
    %v78 = vld [vmem:[#allocation2 + $0x20] sm:$0xf]
    %v79 = vld [vmem:[#allocation2 + $0x24] sm:$0xf]
    %v80 = vld [vmem:[#allocation2 + $0x28] sm:$0xf]
    %v81 = vld [vmem:[#allocation2 + $0x2c] sm:$0xf]
    %v82 = vld [vmem:[#allocation2 + $0x30] sm:$0xf]
    %v83 = vld [vmem:[#allocation2 + $0x34] sm:$0xf]
    %v84 = vld [vmem:[#allocation2 + $0x38] sm:$0xf]
    %v85 = vld [vmem:[#allocation2 + $0x3c] sm:$0xf]
    %v86 = vld [vmem:[%s2] sm:$0x1]
    %v88 = vlaneseq
    %v89 = vshrl.u32 %v88, 7
    %v90 = vsub.s32 0, %v89
    %v91 = vrot.slane %v86, %v90
    %v95 = vunpack.c.l.b16 %v68
    %v96 = vunpack.c.l.b16 %v69
    %v97 = vpack.c.b16 %v96, %v95
    %v115 = vunpack.c.l.b16 %v70
    %v116 = vunpack.c.l.b16 %v71
    %v117 = vunpack.c.l.b16 %v72
    %v118 = vunpack.c.l.b16 %v73
    %v119 = vunpack.c.l.b16 %v74
    %v120 = vunpack.c.l.b16 %v75
    %v121 = vunpack.c.l.b16 %v76
    %v122 = vunpack.c.l.b16 %v77
    %v123 = vunpack.c.l.b16 %v78
    %v124 = vunpack.c.l.b16 %v79
    %v125 = vunpack.c.l.b16 %v80
    %v126 = vunpack.c.l.b16 %v81
    %v127 = vunpack.c.l.b16 %v82
    %v128 = vunpack.c.l.b16 %v83
    %v129 = vunpack.c.l.b16 %v84
    %v130 = vunpack.c.l.b16 %v85
    %v131 = vpack.c.b16 %v116, %v115
    %v132 = vpack.c.b16 %v118, %v117
    %v133 = vpack.c.b16 %v120, %v119
    %v134 = vpack.c.b16 %v122, %v121
    %v135 = vpack.c.b16 %v124, %v123
    %v136 = vpack.c.b16 %v126, %v125
    %v137 = vpack.c.b16 %v128, %v127
    %v138 = vpack.c.b16 %v130, %v129
    %147 = vmatprep.subr.bf16.mxu0 0
    %148 = vmatpush1.bf16.msra.mxu0 %v138
    %149 = vmatprep.subr.bf16.mxu0 0
    %150 = vmatpush1.bf16.msra.mxu0 %v137
    %151 = vmatprep.subr.bf16.mxu0 0
    %152 = vmatpush1.bf16.msra.mxu0 %v136
    %153 = vmatprep.subr.bf16.mxu0 0
    %154 = vmatpush1.bf16.msra.mxu0 %v135
    %155 = vmatprep.subr.bf16.mxu0 0
    %156 = vmatpush1.bf16.msra.mxu0 %v134
    %157 = vmatprep.subr.bf16.mxu0 0
    %158 = vmatpush1.bf16.msra.mxu0 %v133
    %159 = vmatprep.subr.bf16.mxu0 0
    %160 = vmatpush1.bf16.msra.mxu0 %v132
    %161 = vmatprep.subr.bf16.mxu0 0
    %162 = vmatpush1.bf16.msra.mxu0 %v131
    %163 = vmatprep.subr.bf16.mxu0 0
    %164 = vmatpush2.bf16.msra.mxu0 0
    %165 = vmatprep.subr.bf16.mxu0 0
    %166 = vmatpush2.bf16.msra.mxu0 0
    %167 = vmatprep.subr.bf16.mxu0 0
    %168 = vmatpush2.bf16.msra.mxu0 0
    %169 = vmatprep.subr.bf16.mxu0 0
    %170 = vmatpush2.bf16.msra.mxu0 0
    %171 = vmatprep.subr.bf16.mxu0 0
    %172 = vmatpush2.bf16.msra.mxu0 0
    %173 = vmatprep.subr.bf16.mxu0 0
    %174 = vmatpush2.bf16.msra.mxu0 0
    %175 = vmatprep.subr.bf16.mxu0 0
    %176 = vmatpush2.bf16.msra.mxu0 0
    %177 = vmatprep.subr.bf16.mxu0 0
    %178 = vmatpush2.bf16.msra.mxu0 0
    %179 = vmatprep.mubr.bf16.mxu0 0
    %180 = vmatmul.mubr.bf16.gmra.mxu0 %v97
    %v181 = vpop.f32.mrf.mxu0
    %v182 = vadd.f32 %v91, %v181
    %v183 = vpop.f32.mrf.mxu0
    %v184 = vpop.f32.mrf.mxu0
    %v185 = vadd.f32 %v91, %v184
    %v186 = vpop.f32.mrf.mxu0
    %187 = vdwg.mxu0
    %vm188 = vcmp.ge.f32.partialorder %v182, 0.0
    %vm189 = vcmp.ge.f32.partialorder %v185, 0.0
    %v190 = vmul.f32 %v182, 0.01
    %v191 = vmul.f32 %v185, 0.01
    %v192 = vsel %vm188, %v182, %v190
    %v193 = vsel %vm189, %v185, %v191
    %v194 = vpack.c.bf16 %v193, %v192
    %v195 = vld [vmem:[#allocation4] sm:$0xf]
    %v196 = vld [vmem:[#allocation4 + $0x4] sm:$0xf]
    %v197 = vld [vmem:[#allocation4 + $0x8] sm:$0xf]
    %v198 = vld [vmem:[#allocation4 + $0xc] sm:$0xf]
    %v199 = vld [vmem:[#allocation4 + $0x10] sm:$0xf]
    %v200 = vld [vmem:[#allocation4 + $0x14] sm:$0xf]
    %v201 = vld [vmem:[#allocation4 + $0x18] sm:$0xf]
    %v202 = vld [vmem:[#allocation4 + $0x1c] sm:$0xf]
    %v203 = vld [vmem:[#allocation4 + $0x20] sm:$0xf]
    %v204 = vld [vmem:[#allocation4 + $0x24] sm:$0xf]
    %v205 = vld [vmem:[#allocation4 + $0x28] sm:$0xf]
    %v206 = vld [vmem:[#allocation4 + $0x2c] sm:$0xf]
    %v207 = vld [vmem:[#allocation4 + $0x30] sm:$0xf]
    %v208 = vld [vmem:[#allocation4 + $0x34] sm:$0xf]
    %v209 = vld [vmem:[#allocation4 + $0x38] sm:$0xf]
    %v210 = vld [vmem:[#allocation4 + $0x3c] sm:$0xf]
    %v211 = vld [vmem:[%s4] sm:$0x1]
    %v213 = vlaneseq
    %v214 = vshrl.u32 %v213, 7
    %v215 = vsub.s32 0, %v214
    %v216 = vrot.slane %v211, %v215
    %v234 = vunpack.c.l.b16 %v195
    %v235 = vunpack.c.l.b16 %v196
    %v236 = vunpack.c.l.b16 %v197
    %v237 = vunpack.c.l.b16 %v198
    %v238 = vunpack.c.l.b16 %v199
    %v239 = vunpack.c.l.b16 %v200
    %v240 = vunpack.c.l.b16 %v201
    %v241 = vunpack.c.l.b16 %v202
    %v242 = vunpack.c.l.b16 %v203
    %v243 = vunpack.c.l.b16 %v204
    %v244 = vunpack.c.l.b16 %v205
    %v245 = vunpack.c.l.b16 %v206
    %v246 = vunpack.c.l.b16 %v207
    %v247 = vunpack.c.l.b16 %v208
    %v248 = vunpack.c.l.b16 %v209
    %v249 = vunpack.c.l.b16 %v210
    %v250 = vpack.c.b16 %v235, %v234
    %v251 = vpack.c.b16 %v237, %v236
    %v252 = vpack.c.b16 %v239, %v238
    %v253 = vpack.c.b16 %v241, %v240
    %v254 = vpack.c.b16 %v243, %v242
    %v255 = vpack.c.b16 %v245, %v244
    %v256 = vpack.c.b16 %v247, %v246
    %v257 = vpack.c.b16 %v249, %v248
    %266 = vmatprep.subr.bf16.mxu0 0
    %267 = vmatpush1.bf16.msra.mxu0 %v257
    %268 = vmatprep.subr.bf16.mxu0 0
    %269 = vmatpush1.bf16.msra.mxu0 %v256
    %270 = vmatprep.subr.bf16.mxu0 0
    %271 = vmatpush1.bf16.msra.mxu0 %v255
    %272 = vmatprep.subr.bf16.mxu0 0
    %273 = vmatpush1.bf16.msra.mxu0 %v254
    %274 = vmatprep.subr.bf16.mxu0 0
    %275 = vmatpush1.bf16.msra.mxu0 %v253
    %276 = vmatprep.subr.bf16.mxu0 0
    %277 = vmatpush1.bf16.msra.mxu0 %v252
    %278 = vmatprep.subr.bf16.mxu0 0
    %279 = vmatpush1.bf16.msra.mxu0 %v251
    %280 = vmatprep.subr.bf16.mxu0 0
    %281 = vmatpush1.bf16.msra.mxu0 %v250
    %282 = vmatprep.subr.bf16.mxu0 0
    %283 = vmatpush2.bf16.msra.mxu0 0
    %284 = vmatprep.subr.bf16.mxu0 0
    %285 = vmatpush2.bf16.msra.mxu0 0
    %286 = vmatprep.subr.bf16.mxu0 0
    %287 = vmatpush2.bf16.msra.mxu0 0
    %288 = vmatprep.subr.bf16.mxu0 0
    %289 = vmatpush2.bf16.msra.mxu0 0
    %290 = vmatprep.subr.bf16.mxu0 0
    %291 = vmatpush2.bf16.msra.mxu0 0
    %292 = vmatprep.subr.bf16.mxu0 0
    %293 = vmatpush2.bf16.msra.mxu0 0
    %294 = vmatprep.subr.bf16.mxu0 0
    %295 = vmatpush2.bf16.msra.mxu0 0
    %296 = vmatprep.subr.bf16.mxu0 0
    %297 = vmatpush2.bf16.msra.mxu0 0
    %298 = vmatprep.mubr.bf16.mxu0 0
    %299 = vmatmul.mubr.bf16.gmra.mxu0 %v194
    %v300 = vpop.f32.mrf.mxu0
    %v301 = vadd.f32 %v216, %v300
    %v302 = vpop.f32.mrf.mxu0
    %v303 = vpop.f32.mrf.mxu0
    %v304 = vadd.f32 %v216, %v303
    %v305 = vpop.f32.mrf.mxu0
    %306 = vdwg.mxu0
    %vm307 = vcmp.ge.f32.partialorder %v301, 0.0
    %vm308 = vcmp.ge.f32.partialorder %v304, 0.0
    %v309 = vmul.f32 %v301, 0.01
    %v310 = vmul.f32 %v304, 0.01
    %v311 = vsel %vm307, %v301, %v309
    %v312 = vsel %vm308, %v304, %v310
    %v313 = vpack.c.bf16 %v312, %v311
    %v314 = vld [vmem:[#allocation6] sm:$0xf]
    %v315 = vld [vmem:[#allocation6 + $0x4] sm:$0xf]
    %v316 = vld [vmem:[#allocation6 + $0x8] sm:$0xf]
    %v317 = vld [vmem:[#allocation6 + $0xc] sm:$0xf]
    %v318 = vld [vmem:[#allocation6 + $0x10] sm:$0xf]
    %v319 = vld [vmem:[#allocation6 + $0x14] sm:$0xf]
    %v320 = vld [vmem:[#allocation6 + $0x18] sm:$0xf]
    %v321 = vld [vmem:[#allocation6 + $0x1c] sm:$0xf]
    %v322 = vld [vmem:[#allocation6 + $0x20] sm:$0xf]
    %v323 = vld [vmem:[#allocation6 + $0x24] sm:$0xf]
    %v324 = vld [vmem:[#allocation6 + $0x28] sm:$0xf]
    %v325 = vld [vmem:[#allocation6 + $0x2c] sm:$0xf]
    %v326 = vld [vmem:[#allocation6 + $0x30] sm:$0xf]
    %v327 = vld [vmem:[#allocation6 + $0x34] sm:$0xf]
    %v328 = vld [vmem:[#allocation6 + $0x38] sm:$0xf]
    %v329 = vld [vmem:[#allocation6 + $0x3c] sm:$0xf]
    %v330 = vld [vmem:[%s6] sm:$0x1]
    %v332 = vlaneseq
    %v333 = vshrl.u32 %v332, 7
    %v334 = vsub.s32 0, %v333
    %v335 = vrot.slane %v330, %v334
    %v353 = vunpack.c.l.b16 %v314
    %v354 = vunpack.c.l.b16 %v315
    %v355 = vunpack.c.l.b16 %v316
    %v356 = vunpack.c.l.b16 %v317
    %v357 = vunpack.c.l.b16 %v318
    %v358 = vunpack.c.l.b16 %v319
    %v359 = vunpack.c.l.b16 %v320
    %v360 = vunpack.c.l.b16 %v321
    %v361 = vunpack.c.l.b16 %v322
    %v362 = vunpack.c.l.b16 %v323
    %v363 = vunpack.c.l.b16 %v324
    %v364 = vunpack.c.l.b16 %v325
    %v365 = vunpack.c.l.b16 %v326
    %v366 = vunpack.c.l.b16 %v327
    %v367 = vunpack.c.l.b16 %v328
    %v368 = vunpack.c.l.b16 %v329
    %v369 = vpack.c.b16 %v354, %v353
    %v370 = vpack.c.b16 %v356, %v355
    %v371 = vpack.c.b16 %v358, %v357
    %v372 = vpack.c.b16 %v360, %v359
    %v373 = vpack.c.b16 %v362, %v361
    %v374 = vpack.c.b16 %v364, %v363
    %v375 = vpack.c.b16 %v366, %v365
    %v376 = vpack.c.b16 %v368, %v367
    %385 = vmatprep.subr.bf16.mxu0 0
    %386 = vmatpush1.bf16.msra.mxu0 %v376
    %387 = vmatprep.subr.bf16.mxu0 0
    %388 = vmatpush1.bf16.msra.mxu0 %v375
    %389 = vmatprep.subr.bf16.mxu0 0
    %390 = vmatpush1.bf16.msra.mxu0 %v374
    %391 = vmatprep.subr.bf16.mxu0 0
    %392 = vmatpush1.bf16.msra.mxu0 %v373
    %393 = vmatprep.subr.bf16.mxu0 0
    %394 = vmatpush1.bf16.msra.mxu0 %v372
    %395 = vmatprep.subr.bf16.mxu0 0
    %396 = vmatpush1.bf16.msra.mxu0 %v371
    %397 = vmatprep.subr.bf16.mxu0 0
    %398 = vmatpush1.bf16.msra.mxu0 %v370
    %399 = vmatprep.subr.bf16.mxu0 0
    %400 = vmatpush1.bf16.msra.mxu0 %v369
    %401 = vmatprep.subr.bf16.mxu0 0
    %402 = vmatpush2.bf16.msra.mxu0 0
    %403 = vmatprep.subr.bf16.mxu0 0
    %404 = vmatpush2.bf16.msra.mxu0 0
    %405 = vmatprep.subr.bf16.mxu0 0
    %406 = vmatpush2.bf16.msra.mxu0 0
    %407 = vmatprep.subr.bf16.mxu0 0
    %408 = vmatpush2.bf16.msra.mxu0 0
    %409 = vmatprep.subr.bf16.mxu0 0
    %410 = vmatpush2.bf16.msra.mxu0 0
    %411 = vmatprep.subr.bf16.mxu0 0
    %412 = vmatpush2.bf16.msra.mxu0 0
    %413 = vmatprep.subr.bf16.mxu0 0
    %414 = vmatpush2.bf16.msra.mxu0 0
    %415 = vmatprep.subr.bf16.mxu0 0
    %416 = vmatpush2.bf16.msra.mxu0 0
    %417 = vmatprep.mubr.bf16.mxu0 0
    %418 = vmatmul.mubr.bf16.gmra.mxu0 %v313
    %v419 = vpop.f32.mrf.mxu0
    %v420 = vadd.f32 %v335, %v419
    %v421 = vpop.f32.mrf.mxu0
    %v422 = vpop.f32.mrf.mxu0
    %v423 = vadd.f32 %v335, %v422
    %v424 = vpop.f32.mrf.mxu0
    %425 = vdwg.mxu0
    %426 = vst [vmem:[%s7] sm:$0xff] %v420
    %427 = vst [vmem:[%s7 + $0x8] sm:$0xff] %v423
    // Predicated region
    $region42: #{_lambda_.1} parent=1 // pred_check
      _
    $region43: #{_lambda_.1} parent=1 // pred_check_branch
      %429 = sbr.rel (0) target = $region45
    $region44: #{_lambda_.1} parent=1 // pred_region
      _
    $region45: #{_lambda_.1} parent=1 // pred_fallthru
      _
    // Predicated region
    $region46: #{_lambda_.1} parent=1 // pred_check
      _
    $region47: #{_lambda_.1} parent=1 // pred_check_branch
      %431 = sbr.rel (0) target = $region49
    $region48: #{_lambda_.1} parent=1 // pred_region
      _
    $region49: #{_lambda_.1} parent=1 // pred_fallthru
      _
    %432 = vsyncpa [#allocation3], 1
    %433 = vsyncpa [#allocation5], 1

// kernel: _lambda_.1
$region0: #{_lambda_.1}
  #allocation0 [shape = 'u32[]', space=smem, size = 0x4, offset = 0x4, fixed_abs, tag = 'smem constant byte address 0x4 - core index']
  #allocation1 [shape = 'u32[144,128]{1,0:T(1,128)}', space=vmem, size = 0x12000, scoped, tag = 'internal scratch']
  %s0 = inlined_call_operand.vmem [shape: bf16[16,128], index: 0, kind: input, shape index: {}]
  %s1 = inlined_call_operand.hbm [shape: bf16[128,128], index: 1, kind: input, shape index: {}]
  %s2 = inlined_call_operand.vmem [shape: f32[1,128], index: 2, kind: input, shape index: {}]
  %s3 = inlined_call_operand.hbm [shape: bf16[128,128], index: 3, kind: input, shape index: {}]
  %s4 = inlined_call_operand.vmem [shape: f32[1,128], index: 4, kind: input, shape index: {}]
  %s5 = inlined_call_operand.hbm [shape: bf16[128,128], index: 5, kind: input, shape index: {}]
  %s6 = inlined_call_operand.vmem [shape: f32[1,128], index: 6, kind: input, shape index: {}]
  %s7 = inlined_call_operand.vmem [shape: f32[16,128], index: 7, kind: output, shape index: {}]
  %s8 = sld [smem:[#allocation0]]
  $region50: #{_lambda_.1} parent=0
    _
  %s10 = ssub.s32 1, %s8
  %s11 = scalar_select 0, %s10, %s8
  $region1: #{_lambda_.1} parent=0
    #allocation2 [shape = 'u8[32768]{0}', space=vmem, size = 0x8000, scoped, tag = 'input window, operand 1, single buffered']
    #allocation3 [shape = 's32[1]{0}', space=sflag, size = 0x4, scoped, tag = 'scoped memory for _lambda_.1']
    #allocation4 [shape = 'u8[32768]{0}', space=vmem, size = 0x8000, scoped, tag = 'input window, operand 3, single buffered']
    #allocation5 [shape = 's32[1]{0}', space=sflag, size = 0x4, scoped, tag = 'scoped memory for _lambda_.1']
    #allocation6 [shape = 'u8[32768]{0}', space=vmem, size = 0x8000, scoped, tag = 'input window, operand 5, single buffered']
    %12 = vsyncpa [#allocation3], 0
    %13 = vsyncpa [#allocation5], 0
    // Predicated region
    $region2: #{_lambda_.1} parent=1 // pred_check
      _
    $region3: #{_lambda_.1} parent=1 // pred_check_branch
      %15 = sbr.rel (0) target = $region5
    $region4: #{_lambda_.1} parent=1 // pred_region
      _
    $region5: #{_lambda_.1} parent=1 // pred_fallthru
      _
    // Predicated region
    $region6: #{_lambda_.1} parent=1 // pred_check
      _
    $region7: #{_lambda_.1} parent=1 // pred_check_branch
      %17 = sbr.rel (0) target = $region9
    $region8: #{_lambda_.1} parent=1 // pred_region
      %s19 = ssub.s32 1024, 1024
      %20 = vsyncadd [#allocation3], %s19
      %s21 = sshll.u32 [#allocation2], 4
      %s22 = int_to_ptr.vmem [resolvable:$true] %s21
      %27 = dma.hbm_to_vmem [thread:$0]  %s1, 1024, %s22, [#allocation3], 64, 64, 4
    $region9: #{_lambda_.1} parent=1 // pred_fallthru
      _
    // Predicated region
    $region10: #{_lambda_.1} parent=1 // pred_check
      _
    $region11: #{_lambda_.1} parent=1 // pred_check_branch
      %29 = sbr.rel (0) target = $region13
    $region12: #{_lambda_.1} parent=1 // pred_region
      _
    $region13: #{_lambda_.1} parent=1 // pred_fallthru
      _
    // Predicated region
    $region14: #{_lambda_.1} parent=1 // pred_check
      _
    $region15: #{_lambda_.1} parent=1 // pred_check_branch
      %31 = sbr.rel (0) target = $region17
    $region16: #{_lambda_.1} parent=1 // pred_region
      %s33 = ssub.s32 1024, 1024
      %34 = vsyncadd [#allocation5], %s33
      %s35 = sshll.u32 [#allocation4], 4
      %s36 = int_to_ptr.vmem [resolvable:$true] %s35
      %41 = dma.hbm_to_vmem [thread:$0]  %s3, 1024, %s36, [#allocation5], 64, 64, 4
    $region17: #{_lambda_.1} parent=1 // pred_fallthru
      _
    // Predicated region
    $region18: #{_lambda_.1} parent=1 // pred_check
      _
    $region19: #{_lambda_.1} parent=1 // pred_check_branch
      %43 = sbr.rel (0) target = $region21
    $region20: #{_lambda_.1} parent=1 // pred_region
      _
    $region21: #{_lambda_.1} parent=1 // pred_fallthru
      _
    // Predicated region
    $region22: #{_lambda_.1} parent=1 // pred_check
      _
    $region23: #{_lambda_.1} parent=1 // pred_check_branch
      %45 = sbr.rel (0) target = $region25
    $region24: #{_lambda_.1} parent=1 // pred_region
      %s47 = ssub.s32 1024, 1024
      %48 = vsyncadd [#allocation5], %s47
      %s49 = sshll.u32 [#allocation6], 4
      %s50 = int_to_ptr.vmem [resolvable:$true] %s49
      %55 = dma.hbm_to_vmem [thread:$0]  %s5, 1024, %s50, [#allocation5], 64, 64, 4
    $region25: #{_lambda_.1} parent=1 // pred_fallthru
      _
    // Predicated region
    $region26: #{_lambda_.1} parent=1 // pred_check
      _
    $region27: #{_lambda_.1} parent=1 // pred_check_branch
      %57 = sbr.rel (0) target = $region29
    $region28: #{_lambda_.1} parent=1 // pred_region
      _
    $region29: #{_lambda_.1} parent=1 // pred_fallthru
      _
    // Predicated region
    $region30: #{_lambda_.1} parent=1 // pred_check
      _
    $region31: #{_lambda_.1} parent=1 // pred_check_branch
      %59 = sbr.rel (0) target = $region33
    $region32: #{_lambda_.1} parent=1 // pred_region
      %60 = dma.done [#allocation3], 1024
    $region33: #{_lambda_.1} parent=1 // pred_fallthru
      _
    // Predicated region
    $region34: #{_lambda_.1} parent=1 // pred_check
      _
    $region35: #{_lambda_.1} parent=1 // pred_check_branch
      %62 = sbr.rel (0) target = $region37
    $region36: #{_lambda_.1} parent=1 // pred_region
      %63 = dma.done [#allocation5], 1024
    $region37: #{_lambda_.1} parent=1 // pred_fallthru
      _
    // Predicated region
    $region38: #{_lambda_.1} parent=1 // pred_check
      _
    $region39: #{_lambda_.1} parent=1 // pred_check_branch
      %65 = sbr.rel (0) target = $region41
    $region40: #{_lambda_.1} parent=1 // pred_region
      %66 = dma.done [#allocation5], 1024
    $region41: #{_lambda_.1} parent=1 // pred_fallthru
      _
    %v68 = vld [vmem:[%s0] sm:$0xf]
    %v69 = vld [vmem:[%s0 + $0x4] sm:$0xf]
    %v70 = vld [vmem:[#allocation2] sm:$0xf]
    %v71 = vld [vmem:[#allocation2 + $0x4] sm:$0xf]
    %v72 = vld [vmem:[#allocation2 + $0x8] sm:$0xf]
    %v73 = vld [vmem:[#allocation2 + $0xc] sm:$0xf]
    %v74 = vld [vmem:[#allocation2 + $0x10] sm:$0xf]
    %v75 = vld [vmem:[#allocation2 + $0x14] sm:$0xf]
    %v76 = vld [vmem:[#allocation2 + $0x18] sm:$0xf]
    %v77 = vld [vmem:[#allocation2 + $0x1c] sm:$0xf]
    %v78 = vld [vmem:[#allocation2 + $0x20] sm:$0xf]
    %v79 = vld [vmem:[#allocation2 + $0x24] sm:$0xf]
    %v80 = vld [vmem:[#allocation2 + $0x28] sm:$0xf]
    %v81 = vld [vmem:[#allocation2 + $0x2c] sm:$0xf]
    %v82 = vld [vmem:[#allocation2 + $0x30] sm:$0xf]
    %v83 = vld [vmem:[#allocation2 + $0x34] sm:$0xf]
    %v84 = vld [vmem:[#allocation2 + $0x38] sm:$0xf]
    %v85 = vld [vmem:[#allocation2 + $0x3c] sm:$0xf]
    %v86 = vld [vmem:[%s2] sm:$0x1]
    %v88 = vlaneseq
    %v89 = vshrl.u32 %v88, 7
    %v90 = vsub.s32 0, %v89
    %v91 = vrot.slane %v86, %v90
    %v95 = vunpack.c.l.b16 %v68
    %v96 = vunpack.c.l.b16 %v69
    %v97 = vpack.c.b16 %v96, %v95
    %v115 = vunpack.c.l.b16 %v70
    %v116 = vunpack.c.l.b16 %v71
    %v117 = vunpack.c.l.b16 %v72
    %v118 = vunpack.c.l.b16 %v73
    %v119 = vunpack.c.l.b16 %v74
    %v120 = vunpack.c.l.b16 %v75
    %v121 = vunpack.c.l.b16 %v76
    %v122 = vunpack.c.l.b16 %v77
    %v123 = vunpack.c.l.b16 %v78
    %v124 = vunpack.c.l.b16 %v79
    %v125 = vunpack.c.l.b16 %v80
    %v126 = vunpack.c.l.b16 %v81
    %v127 = vunpack.c.l.b16 %v82
    %v128 = vunpack.c.l.b16 %v83
    %v129 = vunpack.c.l.b16 %v84
    %v130 = vunpack.c.l.b16 %v85
    %v131 = vpack.c.b16 %v116, %v115
    %v132 = vpack.c.b16 %v118, %v117
    %v133 = vpack.c.b16 %v120, %v119
    %v134 = vpack.c.b16 %v122, %v121
    %v135 = vpack.c.b16 %v124, %v123
    %v136 = vpack.c.b16 %v126, %v125
    %v137 = vpack.c.b16 %v128, %v127
    %v138 = vpack.c.b16 %v130, %v129
    %147 = vmatprep.subr.bf16.mxu0 0
    %148 = vmatpush1.bf16.msra.mxu0 %v138
    %149 = vmatprep.subr.bf16.mxu0 0
    %150 = vmatpush1.bf16.msra.mxu0 %v137
    %151 = vmatprep.subr.bf16.mxu0 0
    %152 = vmatpush1.bf16.msra.mxu0 %v136
    %153 = vmatprep.subr.bf16.mxu0 0
    %154 = vmatpush1.bf16.msra.mxu0 %v135
    %155 = vmatprep.subr.bf16.mxu0 0
    %156 = vmatpush1.bf16.msra.mxu0 %v134
    %157 = vmatprep.subr.bf16.mxu0 0
    %158 = vmatpush1.bf16.msra.mxu0 %v133
    %159 = vmatprep.subr.bf16.mxu0 0
    %160 = vmatpush1.bf16.msra.mxu0 %v132
    %161 = vmatprep.subr.bf16.mxu0 0
    %162 = vmatpush1.bf16.msra.mxu0 %v131
    %163 = vmatprep.subr.bf16.mxu0 0
    %164 = vmatpush2.bf16.msra.mxu0 0
    %165 = vmatprep.subr.bf16.mxu0 0
    %166 = vmatpush2.bf16.msra.mxu0 0
    %167 = vmatprep.subr.bf16.mxu0 0
    %168 = vmatpush2.bf16.msra.mxu0 0
    %169 = vmatprep.subr.bf16.mxu0 0
    %170 = vmatpush2.bf16.msra.mxu0 0
    %171 = vmatprep.subr.bf16.mxu0 0
    %172 = vmatpush2.bf16.msra.mxu0 0
    %173 = vmatprep.subr.bf16.mxu0 0
    %174 = vmatpush2.bf16.msra.mxu0 0
    %175 = vmatprep.subr.bf16.mxu0 0
    %176 = vmatpush2.bf16.msra.mxu0 0
    %177 = vmatprep.subr.bf16.mxu0 0
    %178 = vmatpush2.bf16.msra.mxu0 0
    %179 = vmatprep.mubr.bf16.mxu0 0
    %180 = vmatmul.mubr.bf16.gmra.mxu0 %v97
    %v181 = vpop.f32.mrf.mxu0
    %v182 = vadd.f32 %v91, %v181
    %v183 = vpop.f32.mrf.mxu0
    %v184 = vpop.f32.mrf.mxu0
    %v185 = vadd.f32 %v91, %v184
    %v186 = vpop.f32.mrf.mxu0
    %187 = vdwg.mxu0
    %vm188 = vcmp.ge.f32.partialorder %v182, 0.0
    %vm189 = vcmp.ge.f32.partialorder %v185, 0.0
    %v190 = vmul.f32 %v182, 0.01
    %v191 = vmul.f32 %v185, 0.01
    %v192 = vsel %vm188, %v182, %v190
    %v193 = vsel %vm189, %v185, %v191
    %v194 = vpack.c.bf16 %v193, %v192
    %v195 = vld [vmem:[#allocation4] sm:$0xf]
    %v196 = vld [vmem:[#allocation4 + $0x4] sm:$0xf]
    %v197 = vld [vmem:[#allocation4 + $0x8] sm:$0xf]
    %v198 = vld [vmem:[#allocation4 + $0xc] sm:$0xf]
    %v199 = vld [vmem:[#allocation4 + $0x10] sm:$0xf]
    %v200 = vld [vmem:[#allocation4 + $0x14] sm:$0xf]
    %v201 = vld [vmem:[#allocation4 + $0x18] sm:$0xf]
    %v202 = vld [vmem:[#allocation4 + $0x1c] sm:$0xf]
    %v203 = vld [vmem:[#allocation4 + $0x20] sm:$0xf]
    %v204 = vld [vmem:[#allocation4 + $0x24] sm:$0xf]
    %v205 = vld [vmem:[#allocation4 + $0x28] sm:$0xf]
    %v206 = vld [vmem:[#allocation4 + $0x2c] sm:$0xf]
    %v207 = vld [vmem:[#allocation4 + $0x30] sm:$0xf]
    %v208 = vld [vmem:[#allocation4 + $0x34] sm:$0xf]
    %v209 = vld [vmem:[#allocation4 + $0x38] sm:$0xf]
    %v210 = vld [vmem:[#allocation4 + $0x3c] sm:$0xf]
    %v211 = vld [vmem:[%s4] sm:$0x1]
    %v213 = vlaneseq
    %v214 = vshrl.u32 %v213, 7
    %v215 = vsub.s32 0, %v214
    %v216 = vrot.slane %v211, %v215
    %v234 = vunpack.c.l.b16 %v195
    %v235 = vunpack.c.l.b16 %v196
    %v236 = vunpack.c.l.b16 %v197
    %v237 = vunpack.c.l.b16 %v198
    %v238 = vunpack.c.l.b16 %v199
    %v239 = vunpack.c.l.b16 %v200
    %v240 = vunpack.c.l.b16 %v201
    %v241 = vunpack.c.l.b16 %v202
    %v242 = vunpack.c.l.b16 %v203
    %v243 = vunpack.c.l.b16 %v204
    %v244 = vunpack.c.l.b16 %v205
    %v245 = vunpack.c.l.b16 %v206
    %v246 = vunpack.c.l.b16 %v207
    %v247 = vunpack.c.l.b16 %v208
    %v248 = vunpack.c.l.b16 %v209
    %v249 = vunpack.c.l.b16 %v210
    %v250 = vpack.c.b16 %v235, %v234
    %v251 = vpack.c.b16 %v237, %v236
    %v252 = vpack.c.b16 %v239, %v238
    %v253 = vpack.c.b16 %v241, %v240
    %v254 = vpack.c.b16 %v243, %v242
    %v255 = vpack.c.b16 %v245, %v244
    %v256 = vpack.c.b16 %v247, %v246
    %v257 = vpack.c.b16 %v249, %v248
    %266 = vmatprep.subr.bf16.mxu0 0
    %267 = vmatpush1.bf16.msra.mxu0 %v257
    %268 = vmatprep.subr.bf16.mxu0 0
    %269 = vmatpush1.bf16.msra.mxu0 %v256
    %270 = vmatprep.subr.bf16.mxu0 0
    %271 = vmatpush1.bf16.msra.mxu0 %v255
    %272 = vmatprep.subr.bf16.mxu0 0
    %273 = vmatpush1.bf16.msra.mxu0 %v254
    %274 = vmatprep.subr.bf16.mxu0 0
    %275 = vmatpush1.bf16.msra.mxu0 %v253
    %276 = vmatprep.subr.bf16.mxu0 0
    %277 = vmatpush1.bf16.msra.mxu0 %v252
    %278 = vmatprep.subr.bf16.mxu0 0
    %279 = vmatpush1.bf16.msra.mxu0 %v251
    %280 = vmatprep.subr.bf16.mxu0 0
    %281 = vmatpush1.bf16.msra.mxu0 %v250
    %282 = vmatprep.subr.bf16.mxu0 0
    %283 = vmatpush2.bf16.msra.mxu0 0
    %284 = vmatprep.subr.bf16.mxu0 0
    %285 = vmatpush2.bf16.msra.mxu0 0
    %286 = vmatprep.subr.bf16.mxu0 0
    %287 = vmatpush2.bf16.msra.mxu0 0
    %288 = vmatprep.subr.bf16.mxu0 0
    %289 = vmatpush2.bf16.msra.mxu0 0
    %290 = vmatprep.subr.bf16.mxu0 0
    %291 = vmatpush2.bf16.msra.mxu0 0
    %292 = vmatprep.subr.bf16.mxu0 0
    %293 = vmatpush2.bf16.msra.mxu0 0
    %294 = vmatprep.subr.bf16.mxu0 0
    %295 = vmatpush2.bf16.msra.mxu0 0
    %296 = vmatprep.subr.bf16.mxu0 0
    %297 = vmatpush2.bf16.msra.mxu0 0
    %298 = vmatprep.mubr.bf16.mxu0 0
    %299 = vmatmul.mubr.bf16.gmra.mxu0 %v194
    %v300 = vpop.f32.mrf.mxu0
    %v301 = vadd.f32 %v216, %v300
    %v302 = vpop.f32.mrf.mxu0
    %v303 = vpop.f32.mrf.mxu0
    %v304 = vadd.f32 %v216, %v303
    %v305 = vpop.f32.mrf.mxu0
    %306 = vdwg.mxu0
    %vm307 = vcmp.ge.f32.partialorder %v301, 0.0
    %vm308 = vcmp.ge.f32.partialorder %v304, 0.0
    %v309 = vmul.f32 %v301, 0.01
    %v310 = vmul.f32 %v304, 0.01
    %v311 = vsel %vm307, %v301, %v309
    %v312 = vsel %vm308, %v304, %v310
    %v313 = vpack.c.bf16 %v312, %v311
    %v314 = vld [vmem:[#allocation6] sm:$0xf]
    %v315 = vld [vmem:[#allocation6 + $0x4] sm:$0xf]
    %v316 = vld [vmem:[#allocation6 + $0x8] sm:$0xf]
    %v317 = vld [vmem:[#allocation6 + $0xc] sm:$0xf]
    %v318 = vld [vmem:[#allocation6 + $0x10] sm:$0xf]
    %v319 = vld [vmem:[#allocation6 + $0x14] sm:$0xf]
    %v320 = vld [vmem:[#allocation6 + $0x18] sm:$0xf]
    %v321 = vld [vmem:[#allocation6 + $0x1c] sm:$0xf]
    %v322 = vld [vmem:[#allocation6 + $0x20] sm:$0xf]
    %v323 = vld [vmem:[#allocation6 + $0x24] sm:$0xf]
    %v324 = vld [vmem:[#allocation6 + $0x28] sm:$0xf]
    %v325 = vld [vmem:[#allocation6 + $0x2c] sm:$0xf]
    %v326 = vld [vmem:[#allocation6 + $0x30] sm:$0xf]
    %v327 = vld [vmem:[#allocation6 + $0x34] sm:$0xf]
    %v328 = vld [vmem:[#allocation6 + $0x38] sm:$0xf]
    %v329 = vld [vmem:[#allocation6 + $0x3c] sm:$0xf]
    %v330 = vld [vmem:[%s6] sm:$0x1]
    %v332 = vlaneseq
    %v333 = vshrl.u32 %v332, 7
    %v334 = vsub.s32 0, %v333
    %v335 = vrot.slane %v330, %v334
    %v353 = vunpack.c.l.b16 %v314
    %v354 = vunpack.c.l.b16 %v315
    %v355 = vunpack.c.l.b16 %v316
    %v356 = vunpack.c.l.b16 %v317
    %v357 = vunpack.c.l.b16 %v318
    %v358 = vunpack.c.l.b16 %v319
    %v359 = vunpack.c.l.b16 %v320
    %v360 = vunpack.c.l.b16 %v321
    %v361 = vunpack.c.l.b16 %v322
    %v362 = vunpack.c.l.b16 %v323
    %v363 = vunpack.c.l.b16 %v324
    %v364 = vunpack.c.l.b16 %v325
    %v365 = vunpack.c.l.b16 %v326
    %v366 = vunpack.c.l.b16 %v327
    %v367 = vunpack.c.l.b16 %v328
    %v368 = vunpack.c.l.b16 %v329
    %v369 = vpack.c.b16 %v354, %v353
    %v370 = vpack.c.b16 %v356, %v355
    %v371 = vpack.c.b16 %v358, %v357
    %v372 = vpack.c.b16 %v360, %v359
    %v373 = vpack.c.b16 %v362, %v361
    %v374 = vpack.c.b16 %v364, %v363
    %v375 = vpack.c.b16 %v366, %v365
    %v376 = vpack.c.b16 %v368, %v367
    %385 = vmatprep.subr.bf16.mxu0 0
    %386 = vmatpush1.bf16.msra.mxu0 %v376
    %387 = vmatprep.subr.bf16.mxu0 0
    %388 = vmatpush1.bf16.msra.mxu0 %v375
    %389 = vmatprep.subr.bf16.mxu0 0
    %390 = vmatpush1.bf16.msra.mxu0 %v374
    %391 = vmatprep.subr.bf16.mxu0 0
    %392 = vmatpush1.bf16.msra.mxu0 %v373
    %393 = vmatprep.subr.bf16.mxu0 0
    %394 = vmatpush1.bf16.msra.mxu0 %v372
    %395 = vmatprep.subr.bf16.mxu0 0
    %396 = vmatpush1.bf16.msra.mxu0 %v371
    %397 = vmatprep.subr.bf16.mxu0 0
    %398 = vmatpush1.bf16.msra.mxu0 %v370
    %399 = vmatprep.subr.bf16.mxu0 0
    %400 = vmatpush1.bf16.msra.mxu0 %v369
    %401 = vmatprep.subr.bf16.mxu0 0
    %402 = vmatpush2.bf16.msra.mxu0 0
    %403 = vmatprep.subr.bf16.mxu0 0
    %404 = vmatpush2.bf16.msra.mxu0 0
    %405 = vmatprep.subr.bf16.mxu0 0
    %406 = vmatpush2.bf16.msra.mxu0 0
    %407 = vmatprep.subr.bf16.mxu0 0
    %408 = vmatpush2.bf16.msra.mxu0 0
    %409 = vmatprep.subr.bf16.mxu0 0
    %410 = vmatpush2.bf16.msra.mxu0 0
    %411 = vmatprep.subr.bf16.mxu0 0
    %412 = vmatpush2.bf16.msra.mxu0 0
    %413 = vmatprep.subr.bf16.mxu0 0
    %414 = vmatpush2.bf16.msra.mxu0 0
    %415 = vmatprep.subr.bf16.mxu0 0
    %416 = vmatpush2.bf16.msra.mxu0 0
    %417 = vmatprep.mubr.bf16.mxu0 0
    %418 = vmatmul.mubr.bf16.gmra.mxu0 %v313
    %v419 = vpop.f32.mrf.mxu0
    %v420 = vadd.f32 %v335, %v419
    %v421 = vpop.f32.mrf.mxu0
    %v422 = vpop.f32.mrf.mxu0
    %v423 = vadd.f32 %v335, %v422
    %v424 = vpop.f32.mrf.mxu0
    %425 = vdwg.mxu0
    %426 = vst [vmem:[%s7] sm:$0xff] %v420
    %427 = vst [vmem:[%s7 + $0x8] sm:$0xff] %v423
    // Predicated region
    $region42: #{_lambda_.1} parent=1 // pred_check
      _
    $region43: #{_lambda_.1} parent=1 // pred_check_branch
      %429 = sbr.rel (0) target = $region45
    $region44: #{_lambda_.1} parent=1 // pred_region
      _
    $region45: #{_lambda_.1} parent=1 // pred_fallthru
      _
    // Predicated region
    $region46: #{_lambda_.1} parent=1 // pred_check
      _
    $region47: #{_lambda_.1} parent=1 // pred_check_branch
      %431 = sbr.rel (0) target = $region49
    $region48: #{_lambda_.1} parent=1 // pred_region
      _
    $region49: #{_lambda_.1} parent=1 // pred_fallthru
      _
    %432 = vsyncpa [#allocation3], 1
    %433 = vsyncpa [#allocation5], 1

</llo_original>
